<compile_context>
chip_gen: v7x
topology: tpu7x:2x2x1
jax: 0.10.0
libtpu: 0.0.40
codegen_flags: <defaults>
</compile_context>

<pallas_src>
import functools

import numpy as np
import jax
import jax.numpy as jnp
from jax.experimental import pallas as pl
from jax.experimental.pallas import tpu as pltpu

_HALF_LOG_2PI = 0.5 * float(np.log(2.0 * np.pi))
_LANE = 128
_SUBLANE = 8


def _round_up(x, m):
    return ((x + m - 1) // m) * m


def _use_bf16_activations():
    """bf16 VPU/EUP exists on v6e/v7x; keep f32 elementwise math on <= v5."""
    try:
        kind = jax.devices()[0].device_kind.lower()
    except Exception:
        return True
    return not any(t in kind for t in ("v2", "v3", "v4", "v5"))


def _choose_tile(B, block_m):
    """Adaptive batch tile: minimize padding, keep >=2 grid steps for non-tiny
    batches so both v7x TensorCores get work."""
    n_steps = max(1, -(-B // block_m))
    if B >= 256 and n_steps < 2:
        n_steps = 2
    tm = _round_up(-(-B // n_steps), _SUBLANE)
    b_p = tm * n_steps
    return tm, b_p, n_steps


# ----------------------------------------------------------------------------
# Kernel
# ----------------------------------------------------------------------------
def _actor_kernel(obs_ref, act_ref, w1_ref, b1_ref, w2_ref, b2_ref,
                  w3_ref, b3_ref, inv_std_ref, const_ref,
                  mean_ref, logp_ref, *, act_dim, bf16_act):
    dt_act = jnp.bfloat16 if bf16_act else jnp.float32

    # --- network: Linear -> Tanh -> Linear -> Tanh -> Linear -> Identity ---
    # Matmul operands bf16 (MXU-native), accumulation in f32; tanh in bf16 on
    # v6e/v7x (bf16 EUP), f32 on older generations.
    h1 = jnp.tanh(
        (jnp.dot(obs_ref[...], w1_ref[...], preferred_element_type=jnp.float32)
         + b1_ref[...]).astype(dt_act))
    h2 = jnp.tanh(
        (jnp.dot(h1.astype(jnp.bfloat16), w2_ref[...],
                 preferred_element_type=jnp.float32)
         + b2_ref[...]).astype(dt_act))
    mean_full = (jnp.dot(h2.astype(jnp.bfloat16), w3_ref[...],
                         preferred_element_type=jnp.float32) + b3_ref[...])

    # w3/b3 pad columns only affect lanes >= act_dim, sliced off right here,
    # so no zero-padding invariant is load-bearing for mean or logp.
    mean = mean_full[:, :act_dim]
    mean_ref[...] = mean

    # --- Normal(mean, exp(log_std)).log_prob(action).sum(-1) ---
    # inv_std = exp(-log_std) and const = -(sum(log_std) + D/2*log(2pi)) are
    # precomputed in prepare_params (no per-tile exp / cross-lane reduce).
    z = (act_ref[...] - mean) * inv_std_ref[...]
    quad = jnp.sum(z * z, axis=-1, keepdims=True)        # (tm, 1)
    logp_ref[...] = -0.5 * quad + const_ref[...]


# ----------------------------------------------------------------------------
# Wrapper
# ----------------------------------------------------------------------------
def prepare_params(params):
    """Pad weights once to MXU-friendly shapes (hidden / output lanes -> 128),
    cast matmul operands to bf16, and hoist the log_prob constants."""
    w1, b1, w2, b2, w3, b3, log_std = params
    obs_dim, hid = w1.shape
    act_dim = w3.shape[1]
    hid_p = _round_up(hid, _LANE)
    w3_p = _round_up(act_dim, _LANE)

    def pad2(x, r, c):
        return jnp.pad(x, ((0, r - x.shape[0]), (0, c - x.shape[1])))

    return dict(
        obs_dim=obs_dim, act_dim=act_dim, hid_p=hid_p, w3_p=w3_p,
        # w1 keeps its real input width (obs streamed unpadded in the lane dim).
        w1=pad2(w1, obs_dim, hid_p).astype(jnp.bfloat16),
        b1=pad2(b1, 1, hid_p).astype(jnp.float32),
        w2=pad2(w2, hid_p, hid_p).astype(jnp.bfloat16),
        b2=pad2(b2, 1, hid_p).astype(jnp.float32),
        w3=pad2(w3, hid_p, w3_p).astype(jnp.bfloat16),
        b3=pad2(b3, 1, w3_p).astype(jnp.float32),
        # Hoisted log_prob constants (exact f32, no pad lanes).
        inv_std=jnp.exp(-log_std).astype(jnp.float32),               # (1, act_dim)
        logp_const=(-(jnp.sum(log_std) + act_dim * _HALF_LOG_2PI)
                    ).reshape(1, 1).astype(jnp.float32),             # (1, 1)
        log_std=log_std.astype(jnp.float32),
    )


def actor_forward(obs, action, prepped, *, block_m=512):
    """Continuous Actor.forward(obs, action): returns (mean, std, logp, entropy)."""
    B = obs.shape[0]
    obs_dim, act_dim = prepped["obs_dim"], prepped["act_dim"]
    hid_p, w3_p = prepped["hid_p"], prepped["w3_p"]

    tm, b_p, n_steps = _choose_tile(B, block_m)
    bf16_act = _use_bf16_activations()

    # Cast to the kernel dtype BEFORE padding (no f32 padded intermediate);
    # only the batch dim is padded, feature dims stay at their real width.
    obs_pad = jnp.pad(obs.astype(jnp.bfloat16), ((0, b_p - B), (0, 0)))
    act_pad = jnp.pad(action.astype(jnp.float32), ((0, b_p - B), (0, 0)))

    def row_spec(shape):              # batch-tiled arrays
        return pl.BlockSpec(shape, lambda i: (i, 0))

    def full_spec(shape):             # VMEM-resident weights / constants
        return pl.BlockSpec(shape, lambda i: (0, 0))

    flops = 2 * b_p * (obs_dim * hid_p + hid_p * hid_p + hid_p * w3_p)
    bytes_accessed = (b_p * obs_dim * 2 + b_p * act_dim * 4          # inputs
                      + b_p * (act_dim + 1) * 4                       # outputs
                      + (obs_dim * hid_p + hid_p * hid_p + hid_p * w3_p) * 2
                      + (2 * hid_p + 2 * w3_p + act_dim + 1) * 4)
    cost = pl.CostEstimate(flops=int(flops),
                           transcendentals=int(2 * b_p * hid_p),
                           bytes_accessed=int(bytes_accessed))

    mean_p, logp_p = pl.pallas_call(
        functools.partial(_actor_kernel, act_dim=act_dim, bf16_act=bf16_act),
        out_shape=(jax.ShapeDtypeStruct((b_p, act_dim), jnp.float32),
                   jax.ShapeDtypeStruct((b_p, 1), jnp.float32)),
        grid=(n_steps,),
        in_specs=[
            row_spec((tm, obs_dim)),       # obs tile      (bf16, real width)
            row_spec((tm, act_dim)),       # action tile   (f32, real width)
            full_spec((obs_dim, hid_p)),   # w1 (VMEM-resident across grid)
            full_spec((1, hid_p)),         # b1
            full_spec((hid_p, hid_p)),     # w2
            full_spec((1, hid_p)),         # b2
            full_spec((hid_p, w3_p)),      # w3
            full_spec((1, w3_p)),          # b3
            full_spec((1, act_dim)),       # inv_std = exp(-log_std)
            full_spec((1, 1)),             # -(sum(log_std) + D/2*log(2pi))
        ],
        out_specs=(row_spec((tm, act_dim)),   # mean
                   row_spec((tm, 1))),        # summed log_prob
        compiler_params=pltpu.CompilerParams(
            dimension_semantics=("parallel",)),
        cost_estimate=cost,
    )(obs_pad, act_pad, prepped["w1"], prepped["b1"], prepped["w2"],
      prepped["b2"], prepped["w3"], prepped["b3"], prepped["inv_std"],
      prepped["logp_const"])

    # Batch-pad rows are garbage and are dropped here (do not consume unsliced).
    mean = mean_p[:B]
    logp = logp_p[:B, 0]
    log_std = prepped["log_std"]
    std = jnp.exp(log_std[0])
    # Entropy depends only on log_std -> constant row broadcast lazily.
    ent = jnp.broadcast_to(0.5 + _HALF_LOG_2PI + log_std, (B, act_dim))
    return mean, std, logp, ent


# ----------------------------------------------------------------------------
# Param construction + pure-JAX reference (torch semantics)
# ----------------------------------------------------------------------------
def make_params(key, obs_dim, neuron_num, act_dim):
    ks = jax.random.split(key, 6)

    def linear(kw, kb, fan_in, fan_out):
        bound = 1.0 / np.sqrt(fan_in)
        w = jax.random.uniform(kw, (fan_in, fan_out), jnp.float32, -bound, bound)
        b = jax.random.uniform(kb, (1, fan_out), jnp.float32, -bound, bound)
        return w, b

    w1, b1 = linear(ks[0], ks[1], obs_dim, neuron_num)
    w2, b2 = linear(ks[2], ks[3], neuron_num, neuron_num)
    w3, b3 = linear(ks[4], ks[5], neuron_num, act_dim)
    log_std = jnp.full((1, act_dim), 0.5, dtype=jnp.float32)  # as in __init__
    return (w1, b1, w2, b2, w3, b3, log_std)


def actor_reference(obs, action, params):
    w1, b1, w2, b2, w3, b3, log_std = params
    h1 = jnp.tanh(obs @ w1 + b1)
    h2 = jnp.tanh(h1 @ w2 + b2)
    mean = h2 @ w3 + b3
    logp = jnp.sum(
        -0.5 * ((action - mean) / jnp.exp(log_std)) ** 2 - log_std
        - _HALF_LOG_2PI, axis=-1)
    ent = jnp.broadcast_to(0.5 + _HALF_LOG_2PI + log_std, mean.shape)
    return mean, logp, ent


if __name__ == "__main__":
    obs_dim, neuron_num, act_dim = 16, 32, 4
    key = jax.random.PRNGKey(0)
    k_param, k_obs, k_act = jax.random.split(key, 3)
    params = make_params(k_param, obs_dim, neuron_num, act_dim)
    prepped = prepare_params(params)

    # bf16 matmul operands / activations -> compare against f32 ref, loose tol.
    for batch in (4, 520):   # 520 exercises grid=2 (adaptive tm) + batch padding
        kb = jax.random.fold_in(k_obs, batch)
        ka = jax.random.fold_in(k_act, batch)
        obs = jax.random.normal(kb, (batch, obs_dim), dtype=jnp.float32)
        action = jax.random.normal(ka, (batch, act_dim), dtype=jnp.float32)

        mean, std, logp, ent = actor_forward(obs, action, prepped)
        jax.block_until_ready((mean, std, logp, ent))

        mean_r, logp_r, ent_r = actor_reference(obs, action, params)
        np.testing.assert_allclose(np.asarray(mean), np.asarray(mean_r),
                                   rtol=5e-2, atol=5e-2)
        np.testing.assert_allclose(np.asarray(logp), np.asarray(logp_r),
                                   rtol=5e-2, atol=6e-2)
        np.testing.assert_allclose(np.asarray(ent), np.asarray(ent_r),
                                   rtol=1e-6, atol=1e-6)
        np.testing.assert_allclose(np.asarray(std),
                                   np.asarray(jnp.exp(params[6][0])),
                                   rtol=1e-6, atol=1e-6)

    # TODO(synk): pi.sample() (stochastic action draw) and the discrete
    # Categorical branch of Actor.forward are not implemented in-kernel; only
    # the continuous Normal path with a provided action is reproduced.
    print("KERNEL_OK")
</pallas_src>

<mosaic_0001>
module attributes {stable_mosaic.version = 11 : i64} {
  func.func @_actor_kernel(%arg0: i32, %arg1: memref<8x16xbf16, #tpu.memory_space<vmem>>, %arg2: memref<8x4xf32, #tpu.memory_space<vmem>>, %arg3: memref<16x128xbf16, #tpu.memory_space<vmem>>, %arg4: memref<1x128xf32, #tpu.memory_space<vmem>>, %arg5: memref<128x128xbf16, #tpu.memory_space<vmem>>, %arg6: memref<1x128xf32, #tpu.memory_space<vmem>>, %arg7: memref<128x128xbf16, #tpu.memory_space<vmem>>, %arg8: memref<1x128xf32, #tpu.memory_space<vmem>>, %arg9: memref<1x4xf32, #tpu.memory_space<vmem>>, %arg10: memref<1x1xf32, #tpu.memory_space<vmem>>, %arg11: memref<8x4xf32, #tpu.memory_space<vmem>>, %arg12: memref<8x1xf32, #tpu.memory_space<vmem>>) attributes {dimension_semantics = [#tpu.dimension_semantics<parallel>], iteration_bounds = array<i64: 1>, scalar_prefetch = 0 : i64, scratch_operands = 0 : i64, tpu.core_type = #tpu.core_type<tc>, window_params = [{transform_indices = @transform_0, window_bounds = array<i64: 8, 16>}, {transform_indices = @transform_1, window_bounds = array<i64: 8, 4>}, {pipeline_mode = #tpu.pipeline_mode<synchronous>, transform_indices = @transform_2, window_bounds = array<i64: 16, 128>}, {pipeline_mode = #tpu.pipeline_mode<synchronous>, transform_indices = @transform_3, window_bounds = array<i64: 1, 128>}, {pipeline_mode = #tpu.pipeline_mode<synchronous>, transform_indices = @transform_4, window_bounds = array<i64: 128, 128>}, {pipeline_mode = #tpu.pipeline_mode<synchronous>, transform_indices = @transform_5, window_bounds = array<i64: 1, 128>}, {pipeline_mode = #tpu.pipeline_mode<synchronous>, transform_indices = @transform_6, window_bounds = array<i64: 128, 128>}, {pipeline_mode = #tpu.pipeline_mode<synchronous>, transform_indices = @transform_7, window_bounds = array<i64: 1, 128>}, {pipeline_mode = #tpu.pipeline_mode<synchronous>, transform_indices = @transform_8, window_bounds = array<i64: 1, 4>}, {pipeline_mode = #tpu.pipeline_mode<synchronous>, transform_indices = @transform_9, window_bounds = array<i64: 1, 1>}, {transform_indices = @transform_10, window_bounds = array<i64: 8, 4>}, {transform_indices = @transform_11, window_bounds = array<i64: 8, 1>}]} {
    %c0 = arith.constant 0 : index
    %c0_0 = arith.constant 0 : index
    %0 = vector.load %arg1[%c0, %c0_0] : memref<8x16xbf16, #tpu.memory_space<vmem>>, vector<8x16xbf16>
    %c0_1 = arith.constant 0 : index
    %c0_2 = arith.constant 0 : index
    %1 = vector.load %arg3[%c0_1, %c0_2] : memref<16x128xbf16, #tpu.memory_space<vmem>>, vector<16x128xbf16>
    %cst = arith.constant dense<0.000000e+00> : vector<8x128xf32>
    %2 = tpu.matmul %0, %1, %cst {dimension_numbers = #tpu.dot_dimension_numbers<[1], [0], [0], [1], [0, 0, 1, 1], [], []>} : vector<8x16xbf16>, vector<16x128xbf16>, vector<8x128xf32> -> vector<8x128xf32>
    %c0_3 = arith.constant 0 : index
    %c0_4 = arith.constant 0 : index
    %3 = vector.load %arg4[%c0_3, %c0_4] : memref<1x128xf32, #tpu.memory_space<vmem>>, vector<1x128xf32>
    %4 = vector.broadcast %3 : vector<1x128xf32> to vector<8x128xf32>
    %5 = arith.addf %2, %4 : vector<8x128xf32>
    %6 = arith.truncf %5 : vector<8x128xf32> to vector<8x128xbf16>
    %7 = math.tanh %6 : vector<8x128xbf16>
    %c0_5 = arith.constant 0 : index
    %c0_6 = arith.constant 0 : index
    %8 = vector.load %arg5[%c0_5, %c0_6] : memref<128x128xbf16, #tpu.memory_space<vmem>>, vector<128x128xbf16>
    %cst_7 = arith.constant dense<0.000000e+00> : vector<8x128xf32>
    %9 = tpu.matmul %7, %8, %cst_7 {dimension_numbers = #tpu.dot_dimension_numbers<[1], [0], [0], [1], [0, 0, 1, 1], [], []>} : vector<8x128xbf16>, vector<128x128xbf16>, vector<8x128xf32> -> vector<8x128xf32>
    %c0_8 = arith.constant 0 : index
    %c0_9 = arith.constant 0 : index
    %10 = vector.load %arg6[%c0_8, %c0_9] : memref<1x128xf32, #tpu.memory_space<vmem>>, vector<1x128xf32>
    %11 = vector.broadcast %10 : vector<1x128xf32> to vector<8x128xf32>
    %12 = arith.addf %9, %11 : vector<8x128xf32>
    %13 = arith.truncf %12 : vector<8x128xf32> to vector<8x128xbf16>
    %14 = math.tanh %13 : vector<8x128xbf16>
    %c0_10 = arith.constant 0 : index
    %c0_11 = arith.constant 0 : index
    %15 = vector.load %arg7[%c0_10, %c0_11] : memref<128x128xbf16, #tpu.memory_space<vmem>>, vector<128x128xbf16>
    %cst_12 = arith.constant dense<0.000000e+00> : vector<8x128xf32>
    %16 = tpu.matmul %14, %15, %cst_12 {dimension_numbers = #tpu.dot_dimension_numbers<[1], [0], [0], [1], [0, 0, 1, 1], [], []>} : vector<8x128xbf16>, vector<128x128xbf16>, vector<8x128xf32> -> vector<8x128xf32>
    %c0_13 = arith.constant 0 : index
    %c0_14 = arith.constant 0 : index
    %17 = vector.load %arg8[%c0_13, %c0_14] : memref<1x128xf32, #tpu.memory_space<vmem>>, vector<1x128xf32>
    %18 = vector.broadcast %17 : vector<1x128xf32> to vector<8x128xf32>
    %19 = arith.addf %16, %18 : vector<8x128xf32>
    %20 = vector.extract_strided_slice %19 {offsets = [0, 0], sizes = [8, 4], strides = [1, 1]} : vector<8x128xf32> to vector<8x4xf32>
    %c0_15 = arith.constant 0 : index
    %c0_16 = arith.constant 0 : index
    %21 = vector.load %arg11[%c0_15, %c0_16] : memref<8x4xf32, #tpu.memory_space<vmem>>, vector<8x4xf32>
    tpu.vector_store %arg11[%c0_15, %c0_16], %20 {strides = array<i32>} : memref<8x4xf32, #tpu.memory_space<vmem>>, vector<8x4xf32>,
    %c0_17 = arith.constant 0 : index
    %c0_18 = arith.constant 0 : index
    %22 = vector.load %arg2[%c0_17, %c0_18] : memref<8x4xf32, #tpu.memory_space<vmem>>, vector<8x4xf32>
    %23 = arith.subf %22, %20 : vector<8x4xf32>
    %c0_19 = arith.constant 0 : index
    %c0_20 = arith.constant 0 : index
    %24 = vector.load %arg9[%c0_19, %c0_20] : memref<1x4xf32, #tpu.memory_space<vmem>>, vector<1x4xf32>
    %25 = vector.broadcast %24 : vector<1x4xf32> to vector<8x4xf32>
    %26 = arith.mulf %23, %25 : vector<8x4xf32>
    %27 = arith.mulf %26, %26 : vector<8x4xf32>
    %cst_21 = arith.constant dense<0.000000e+00> : vector<8xf32>
    %28 = vector.multi_reduction <add>, %27, %cst_21 [1] : vector<8x4xf32> to vector<8xf32>
    %29 = vector.shape_cast %28 : vector<8xf32> to vector<8x1xf32>
    %cst_22 = arith.constant -5.000000e-01 : f32
    %30 = vector.broadcast %cst_22 : f32 to vector<8x1xf32>
    %31 = arith.mulf %30, %29 : vector<8x1xf32>
    %c0_23 = arith.constant 0 : index
    %c0_24 = arith.constant 0 : index
    %32 = vector.load %arg10[%c0_23, %c0_24] : memref<1x1xf32, #tpu.memory_space<vmem>>, vector<1x1xf32>
    %33 = vector.broadcast %32 : vector<1x1xf32> to vector<8x1xf32>
    %34 = arith.addf %31, %33 : vector<8x1xf32>
    %c0_25 = arith.constant 0 : index
    %c0_26 = arith.constant 0 : index
    %35 = vector.load %arg12[%c0_25, %c0_26] : memref<8x1xf32, #tpu.memory_space<vmem>>, vector<8x1xf32>
    tpu.vector_store %arg12[%c0_25, %c0_26], %34 {strides = array<i32>} : memref<8x1xf32, #tpu.memory_space<vmem>>, vector<8x1xf32>,
    return
  }
  func.func @transform_0(%arg0: i32) -> (i32, i32) {
    %c0_i32 = arith.constant 0 : i32
    %c0_i32_0 = arith.constant 0 : i32
    return %arg0, %c0_i32 : i32, i32
  }
  func.func @transform_1(%arg0: i32) -> (i32, i32) {
    %c0_i32 = arith.constant 0 : i32
    %c0_i32_0 = arith.constant 0 : i32
    return %arg0, %c0_i32 : i32, i32
  }
  func.func @transform_2(%arg0: i32) -> (i32, i32) {
    %c0_i32 = arith.constant 0 : i32
    %c0_i32_0 = arith.constant 0 : i32
    %c0_i32_1 = arith.constant 0 : i32
    return %c0_i32, %c0_i32_0 : i32, i32
  }
  func.func @transform_3(%arg0: i32) -> (i32, i32) {
    %c0_i32 = arith.constant 0 : i32
    %c0_i32_0 = arith.constant 0 : i32
    %c0_i32_1 = arith.constant 0 : i32
    return %c0_i32, %c0_i32_0 : i32, i32
  }
  func.func @transform_4(%arg0: i32) -> (i32, i32) {
    %c0_i32 = arith.constant 0 : i32
    %c0_i32_0 = arith.constant 0 : i32
    %c0_i32_1 = arith.constant 0 : i32
    return %c0_i32, %c0_i32_0 : i32, i32
  }
  func.func @transform_5(%arg0: i32) -> (i32, i32) {
    %c0_i32 = arith.constant 0 : i32
    %c0_i32_0 = arith.constant 0 : i32
    %c0_i32_1 = arith.constant 0 : i32
    return %c0_i32, %c0_i32_0 : i32, i32
  }
  func.func @transform_6(%arg0: i32) -> (i32, i32) {
    %c0_i32 = arith.constant 0 : i32
    %c0_i32_0 = arith.constant 0 : i32
    %c0_i32_1 = arith.constant 0 : i32
    return %c0_i32, %c0_i32_0 : i32, i32
  }
  func.func @transform_7(%arg0: i32) -> (i32, i32) {
    %c0_i32 = arith.constant 0 : i32
    %c0_i32_0 = arith.constant 0 : i32
    %c0_i32_1 = arith.constant 0 : i32
    return %c0_i32, %c0_i32_0 : i32, i32
  }
  func.func @transform_8(%arg0: i32) -> (i32, i32) {
    %c0_i32 = arith.constant 0 : i32
    %c0_i32_0 = arith.constant 0 : i32
    %c0_i32_1 = arith.constant 0 : i32
    return %c0_i32, %c0_i32_0 : i32, i32
  }
  func.func @transform_9(%arg0: i32) -> (i32, i32) {
    %c0_i32 = arith.constant 0 : i32
    %c0_i32_0 = arith.constant 0 : i32
    %c0_i32_1 = arith.constant 0 : i32
    return %c0_i32, %c0_i32_0 : i32, i32
  }
  func.func @transform_10(%arg0: i32) -> (i32, i32) {
    %c0_i32 = arith.constant 0 : i32
    %c0_i32_0 = arith.constant 0 : i32
    return %arg0, %c0_i32 : i32, i32
  }
  func.func @transform_11(%arg0: i32) -> (i32, i32) {
    %c0_i32 = arith.constant 0 : i32
    %c0_i32_0 = arith.constant 0 : i32
    return %arg0, %c0_i32 : i32, i32
  }
}

</mosaic_0001>

<llo_original>
// kernel: tpu_custom_call.1
$region0: #{tpu_custom_call.1}
  #allocation0 [shape = 'u32[]', space=smem, size = 0x4, offset = 0x4, fixed_abs, tag = 'smem constant byte address 0x4 - core index']
  #allocation1 [shape = 'u32[144,128]{1,0:T(1,128)}', space=vmem, size = 0x12000, scoped, tag = 'internal scratch']
  #allocation2 [shape = 'f32[1,1]{1,0:T(1,128)S(1)}', space=vmem, size = 0x200, scoped, tag = 'scoped memory for tpu_custom_call.1']
  %s0 = inlined_call_operand.vmem [shape: bf16[8,16], index: 0, kind: input, shape index: {}]
  %s1 = inlined_call_operand.vmem [shape: f32[8,4], index: 1, kind: input, shape index: {}]
  %s2 = inlined_call_operand.vmem [shape: bf16[16,128], index: 2, kind: input, shape index: {}]
  %s3 = inlined_call_operand.vmem [shape: f32[1,128], index: 3, kind: input, shape index: {}]
  %s4 = inlined_call_operand.hbm [shape: bf16[128,128], index: 4, kind: input, shape index: {}]
  %s5 = inlined_call_operand.vmem [shape: f32[1,128], index: 5, kind: input, shape index: {}]
  %s6 = inlined_call_operand.hbm [shape: bf16[128,128], index: 6, kind: input, shape index: {}]
  %s7 = inlined_call_operand.vmem [shape: f32[1,128], index: 7, kind: input, shape index: {}]
  %s8 = inlined_call_operand.vmem [shape: f32[1,4], index: 8, kind: input, shape index: {}]
  %s9 = inlined_call_operand.<no memory space> [shape: f32[1,1], index: 9, kind: input, shape index: {}]
  %s10 = inlined_call_operand.vmem [shape: f32[8,4], index: 10, kind: output, shape index: {0}]
  %s11 = inlined_call_operand.vmem [shape: f32[8,1], index: 11, kind: output, shape index: {1}]
  %12 = xla_tuple %s10, %s11
  %s13 = sld [smem:[#allocation0]]
  $region66: #{tpu_custom_call.1} parent=0
    _
  %s15 = ssub.s32 1, %s13
  %s16 = scalar_select 0, %s15, %s13
  %v17 = vstv %s9
  %18 = vst [vmem:[#allocation2] sm:$0x1] %v17
  $region1: #{tpu_custom_call.1} parent=0
    #allocation3 [shape = 'u8[32768]{0}', space=vmem, size = 0x8000, scoped, tag = 'input window, operand 4, single buffered']
    #allocation4 [shape = 's32[1]{0}', space=sflag, size = 0x4, scoped, tag = 'scoped memory for tpu_custom_call.1']
    #allocation5 [shape = 'u8[32768]{0}', space=vmem, size = 0x8000, scoped, tag = 'input window, operand 6, single buffered']
    #allocation6 [shape = 's32[1]{0}', space=sflag, size = 0x4, scoped, tag = 'scoped memory for tpu_custom_call.1']
    %19 = vsyncpa [#allocation4], 0
    %20 = vsyncpa [#allocation6], 0
    // Predicated region
    $region2: #{tpu_custom_call.1} parent=1 // pred_check
      _
    $region3: #{tpu_custom_call.1} parent=1 // pred_check_branch
      %22 = sbr.rel (0) target = $region5
    $region4: #{tpu_custom_call.1} parent=1 // pred_region
      _
    $region5: #{tpu_custom_call.1} parent=1 // pred_fallthru
      _
    // Predicated region
    $region6: #{tpu_custom_call.1} parent=1 // pred_check
      _
    $region7: #{tpu_custom_call.1} parent=1 // pred_check_branch
      %24 = sbr.rel (0) target = $region9
    $region8: #{tpu_custom_call.1} parent=1 // pred_region
      _
    $region9: #{tpu_custom_call.1} parent=1 // pred_fallthru
      _
    // Predicated region
    $region10: #{tpu_custom_call.1} parent=1 // pred_check
      _
    $region11: #{tpu_custom_call.1} parent=1 // pred_check_branch
      %26 = sbr.rel (0) target = $region13
    $region12: #{tpu_custom_call.1} parent=1 // pred_region
      _
    $region13: #{tpu_custom_call.1} parent=1 // pred_fallthru
      _
    // Predicated region
    $region14: #{tpu_custom_call.1} parent=1 // pred_check
      _
    $region15: #{tpu_custom_call.1} parent=1 // pred_check_branch
      %28 = sbr.rel (0) target = $region17
    $region16: #{tpu_custom_call.1} parent=1 // pred_region
      _
    $region17: #{tpu_custom_call.1} parent=1 // pred_fallthru
      _
    // Predicated region
    $region18: #{tpu_custom_call.1} parent=1 // pred_check
      _
    $region19: #{tpu_custom_call.1} parent=1 // pred_check_branch
      %30 = sbr.rel (0) target = $region21
    $region20: #{tpu_custom_call.1} parent=1 // pred_region
      %s32 = ssub.s32 1024, 1024
      %33 = vsyncadd [#allocation4], %s32
      %s34 = sshll.u32 [#allocation3], 4
      %s35 = int_to_ptr.vmem [resolvable:$true] %s34
      %40 = dma.hbm_to_vmem [thread:$0]  %s4, 1024, %s35, [#allocation4], 64, 64, 4
    $region21: #{tpu_custom_call.1} parent=1 // pred_fallthru
      _
    // Predicated region
    $region22: #{tpu_custom_call.1} parent=1 // pred_check
      _
    $region23: #{tpu_custom_call.1} parent=1 // pred_check_branch
      %42 = sbr.rel (0) target = $region25
    $region24: #{tpu_custom_call.1} parent=1 // pred_region
      _
    $region25: #{tpu_custom_call.1} parent=1 // pred_fallthru
      _
    // Predicated region
    $region26: #{tpu_custom_call.1} parent=1 // pred_check
      _
    $region27: #{tpu_custom_call.1} parent=1 // pred_check_branch
      %44 = sbr.rel (0) target = $region29
    $region28: #{tpu_custom_call.1} parent=1 // pred_region
      %s46 = ssub.s32 1024, 1024
      %47 = vsyncadd [#allocation6], %s46
      %s48 = sshll.u32 [#allocation5], 4
      %s49 = int_to_ptr.vmem [resolvable:$true] %s48
      %54 = dma.hbm_to_vmem [thread:$0]  %s6, 1024, %s49, [#allocation6], 64, 64, 4
    $region29: #{tpu_custom_call.1} parent=1 // pred_fallthru
      _
    // Predicated region
    $region30: #{tpu_custom_call.1} parent=1 // pred_check
      _
    $region31: #{tpu_custom_call.1} parent=1 // pred_check_branch
      %56 = sbr.rel (0) target = $region33
    $region32: #{tpu_custom_call.1} parent=1 // pred_region
      _
    $region33: #{tpu_custom_call.1} parent=1 // pred_fallthru
      _
    // Predicated region
    $region34: #{tpu_custom_call.1} parent=1 // pred_check
      _
    $region35: #{tpu_custom_call.1} parent=1 // pred_check_branch
      %58 = sbr.rel (0) target = $region37
    $region36: #{tpu_custom_call.1} parent=1 // pred_region
      _
    $region37: #{tpu_custom_call.1} parent=1 // pred_fallthru
      _
    // Predicated region
    $region38: #{tpu_custom_call.1} parent=1 // pred_check
      _
    $region39: #{tpu_custom_call.1} parent=1 // pred_check_branch
      %60 = sbr.rel (0) target = $region41
    $region40: #{tpu_custom_call.1} parent=1 // pred_region
      _
    $region41: #{tpu_custom_call.1} parent=1 // pred_fallthru
      _
    // Predicated region
    $region42: #{tpu_custom_call.1} parent=1 // pred_check
      _
    $region43: #{tpu_custom_call.1} parent=1 // pred_check_branch
      %62 = sbr.rel (0) target = $region45
    $region44: #{tpu_custom_call.1} parent=1 // pred_region
      %63 = dma.done [#allocation4], 1024
    $region45: #{tpu_custom_call.1} parent=1 // pred_fallthru
      _
    // Predicated region
    $region46: #{tpu_custom_call.1} parent=1 // pred_check
      _
    $region47: #{tpu_custom_call.1} parent=1 // pred_check_branch
      %65 = sbr.rel (0) target = $region49
    $region48: #{tpu_custom_call.1} parent=1 // pred_region
      %66 = dma.done [#allocation6], 1024
    $region49: #{tpu_custom_call.1} parent=1 // pred_fallthru
      _
    %v68 = vld [vmem:[%s0] sm:$0xf]
    %v69 = vld [vmem:[%s2] sm:$0xf]
    %v70 = vld [vmem:[%s2 + $0x4] sm:$0xf]
    %v71 = vld [vmem:[%s3] sm:$0x1]
    %v73 = vlaneseq
    %v74 = vshrl.u32 %v73, 7
    %v75 = vsub.s32 0, %v74
    %v76 = vrot.slane %v71, %v75
    %v80 = vunpack.c.l.b16 %v69
    %v81 = vunpack.c.l.b16 %v70
    %v82 = vpack.c.b16 %v81, %v80
    %vm84 = vcmask 130048
    %v86 = vsel %vm84, %v68, 0
    %88 = vmatprep.subr.bf16.mxu0 0
    %89 = vmatpush1.bf16.msra.mxu0 %v82
    %90 = vmatprep.subr.bf16.mxu0 0
    %91 = vmatpush1.bf16.msra.mxu0 0
    %92 = vmatprep.subr.bf16.mxu0 0
    %93 = vmatpush1.bf16.msra.mxu0 0
    %94 = vmatprep.subr.bf16.mxu0 0
    %95 = vmatpush1.bf16.msra.mxu0 0
    %96 = vmatprep.subr.bf16.mxu0 0
    %97 = vmatpush1.bf16.msra.mxu0 0
    %98 = vmatprep.subr.bf16.mxu0 0
    %99 = vmatpush1.bf16.msra.mxu0 0
    %100 = vmatprep.subr.bf16.mxu0 0
    %101 = vmatpush1.bf16.msra.mxu0 0
    %102 = vmatprep.subr.bf16.mxu0 0
    %103 = vmatpush1.bf16.msra.mxu0 0
    %104 = vmatprep.subr.bf16.mxu0 0
    %105 = vmatpush1.bf16.msra.mxu0 0
    %106 = vmatprep.subr.bf16.mxu0 0
    %107 = vmatpush1.bf16.msra.mxu0 0
    %108 = vmatprep.subr.bf16.mxu0 0
    %109 = vmatpush1.bf16.msra.mxu0 0
    %110 = vmatprep.subr.bf16.mxu0 0
    %111 = vmatpush1.bf16.msra.mxu0 0
    %112 = vmatprep.subr.bf16.mxu0 0
    %113 = vmatpush1.bf16.msra.mxu0 0
    %114 = vmatprep.subr.bf16.mxu0 0
    %115 = vmatpush1.bf16.msra.mxu0 0
    %116 = vmatprep.subr.bf16.mxu0 0
    %117 = vmatpush1.bf16.msra.mxu0 0
    %118 = vmatprep.subr.bf16.mxu0 0
    %119 = vmatpush1.bf16.msra.mxu0 0
    %120 = vmatprep.mubr.bf16.mxu0 0
    %121 = vmatmul.mubr.bf16.gmra.mrb[0].mxu0 %v86
    %v122 = vpop.f32.mrb[0].mxu0
    %v123 = vadd.f32 %v76, %v122
    %v124 = vpop.f32.mrb[0].mxu0
    %v125 = vpop.f32.mrb[0].mxu0
    %v126 = vpop.f32.mrb[0].mxu0
    %127 = vdwg.mxu0
    %v128 = vpack.c.bf16 %v123, %v123
    %v129 = vtanh.bf16.pop %v128
    %v130 = vld [vmem:[#allocation3] sm:$0xf]
    %v131 = vld [vmem:[#allocation3 + $0x4] sm:$0xf]
    %v132 = vld [vmem:[#allocation3 + $0x8] sm:$0xf]
    %v133 = vld [vmem:[#allocation3 + $0xc] sm:$0xf]
    %v134 = vld [vmem:[#allocation3 + $0x10] sm:$0xf]
    %v135 = vld [vmem:[#allocation3 + $0x14] sm:$0xf]
    %v136 = vld [vmem:[#allocation3 + $0x18] sm:$0xf]
    %v137 = vld [vmem:[#allocation3 + $0x1c] sm:$0xf]
    %v138 = vld [vmem:[#allocation3 + $0x20] sm:$0xf]
    %v139 = vld [vmem:[#allocation3 + $0x24] sm:$0xf]
    %v140 = vld [vmem:[#allocation3 + $0x28] sm:$0xf]
    %v141 = vld [vmem:[#allocation3 + $0x2c] sm:$0xf]
    %v142 = vld [vmem:[#allocation3 + $0x30] sm:$0xf]
    %v143 = vld [vmem:[#allocation3 + $0x34] sm:$0xf]
    %v144 = vld [vmem:[#allocation3 + $0x38] sm:$0xf]
    %v145 = vld [vmem:[#allocation3 + $0x3c] sm:$0xf]
    %v146 = vld [vmem:[%s5] sm:$0x1]
    %v148 = vlaneseq
    %v149 = vshrl.u32 %v148, 7
    %v150 = vsub.s32 0, %v149
    %v151 = vrot.slane %v146, %v150
    %v169 = vunpack.c.l.b16 %v130
    %v170 = vunpack.c.l.b16 %v131
    %v171 = vunpack.c.l.b16 %v132
    %v172 = vunpack.c.l.b16 %v133
    %v173 = vunpack.c.l.b16 %v134
    %v174 = vunpack.c.l.b16 %v135
    %v175 = vunpack.c.l.b16 %v136
    %v176 = vunpack.c.l.b16 %v137
    %v177 = vunpack.c.l.b16 %v138
    %v178 = vunpack.c.l.b16 %v139
    %v179 = vunpack.c.l.b16 %v140
    %v180 = vunpack.c.l.b16 %v141
    %v181 = vunpack.c.l.b16 %v142
    %v182 = vunpack.c.l.b16 %v143
    %v183 = vunpack.c.l.b16 %v144
    %v184 = vunpack.c.l.b16 %v145
    %v185 = vpack.c.b16 %v170, %v169
    %v186 = vpack.c.b16 %v172, %v171
    %v187 = vpack.c.b16 %v174, %v173
    %v188 = vpack.c.b16 %v176, %v175
    %v189 = vpack.c.b16 %v178, %v177
    %v190 = vpack.c.b16 %v180, %v179
    %v191 = vpack.c.b16 %v182, %v181
    %v192 = vpack.c.b16 %v184, %v183
    %201 = vmatprep.subr.bf16.mxu0 0
    %202 = vmatpush1.bf16.msra.mxu0 %v185
    %203 = vmatprep.subr.bf16.mxu0 0
    %204 = vmatpush1.bf16.msra.mxu0 %v186
    %205 = vmatprep.subr.bf16.mxu0 0
    %206 = vmatpush1.bf16.msra.mxu0 %v187
    %207 = vmatprep.subr.bf16.mxu0 0
    %208 = vmatpush1.bf16.msra.mxu0 %v188
    %209 = vmatprep.subr.bf16.mxu0 0
    %210 = vmatpush1.bf16.msra.mxu0 %v189
    %211 = vmatprep.subr.bf16.mxu0 0
    %212 = vmatpush1.bf16.msra.mxu0 %v190
    %213 = vmatprep.subr.bf16.mxu0 0
    %214 = vmatpush1.bf16.msra.mxu0 %v191
    %215 = vmatprep.subr.bf16.mxu0 0
    %216 = vmatpush1.bf16.msra.mxu0 %v192
    %217 = vmatprep.subr.bf16.mxu0 0
    %218 = vmatpush1.bf16.msra.mxu0 0
    %219 = vmatprep.subr.bf16.mxu0 0
    %220 = vmatpush1.bf16.msra.mxu0 0
    %221 = vmatprep.subr.bf16.mxu0 0
    %222 = vmatpush1.bf16.msra.mxu0 0
    %223 = vmatprep.subr.bf16.mxu0 0
    %224 = vmatpush1.bf16.msra.mxu0 0
    %225 = vmatprep.subr.bf16.mxu0 0
    %226 = vmatpush1.bf16.msra.mxu0 0
    %227 = vmatprep.subr.bf16.mxu0 0
    %228 = vmatpush1.bf16.msra.mxu0 0
    %229 = vmatprep.subr.bf16.mxu0 0
    %230 = vmatpush1.bf16.msra.mxu0 0
    %231 = vmatprep.subr.bf16.mxu0 0
    %232 = vmatpush1.bf16.msra.mxu0 0
    %233 = vmatprep.mubr.bf16.mxu0 0
    %234 = vmatmul.mubr.bf16.gmra.mrb[0].mxu0 %v129
    %v235 = vpop.f32.mrb[0].mxu0
    %v236 = vadd.f32 %v151, %v235
    %v237 = vpop.f32.mrb[0].mxu0
    %v238 = vpop.f32.mrb[0].mxu0
    %v239 = vpop.f32.mrb[0].mxu0
    %240 = vdwg.mxu0
    %v241 = vpack.c.bf16 %v236, %v236
    %v242 = vtanh.bf16.pop %v241
    %v243 = vld [vmem:[#allocation5] sm:$0xf]
    %v244 = vld [vmem:[#allocation5 + $0x4] sm:$0xf]
    %v245 = vld [vmem:[#allocation5 + $0x8] sm:$0xf]
    %v246 = vld [vmem:[#allocation5 + $0xc] sm:$0xf]
    %v247 = vld [vmem:[#allocation5 + $0x10] sm:$0xf]
    %v248 = vld [vmem:[#allocation5 + $0x14] sm:$0xf]
    %v249 = vld [vmem:[#allocation5 + $0x18] sm:$0xf]
    %v250 = vld [vmem:[#allocation5 + $0x1c] sm:$0xf]
    %v251 = vld [vmem:[#allocation5 + $0x20] sm:$0xf]
    %v252 = vld [vmem:[#allocation5 + $0x24] sm:$0xf]
    %v253 = vld [vmem:[#allocation5 + $0x28] sm:$0xf]
    %v254 = vld [vmem:[#allocation5 + $0x2c] sm:$0xf]
    %v255 = vld [vmem:[#allocation5 + $0x30] sm:$0xf]
    %v256 = vld [vmem:[#allocation5 + $0x34] sm:$0xf]
    %v257 = vld [vmem:[#allocation5 + $0x38] sm:$0xf]
    %v258 = vld [vmem:[#allocation5 + $0x3c] sm:$0xf]
    %v259 = vld [vmem:[%s7] sm:$0x1]
    %v261 = vlaneseq
    %v262 = vshrl.u32 %v261, 7
    %v263 = vsub.s32 0, %v262
    %v264 = vrot.slane %v259, %v263
    %v282 = vunpack.c.l.b16 %v243
    %v283 = vunpack.c.l.b16 %v244
    %v284 = vunpack.c.l.b16 %v245
    %v285 = vunpack.c.l.b16 %v246
    %v286 = vunpack.c.l.b16 %v247
    %v287 = vunpack.c.l.b16 %v248
    %v288 = vunpack.c.l.b16 %v249
    %v289 = vunpack.c.l.b16 %v250
    %v290 = vunpack.c.l.b16 %v251
    %v291 = vunpack.c.l.b16 %v252
    %v292 = vunpack.c.l.b16 %v253
    %v293 = vunpack.c.l.b16 %v254
    %v294 = vunpack.c.l.b16 %v255
    %v295 = vunpack.c.l.b16 %v256
    %v296 = vunpack.c.l.b16 %v257
    %v297 = vunpack.c.l.b16 %v258
    %v298 = vpack.c.b16 %v283, %v282
    %v299 = vpack.c.b16 %v285, %v284
    %v300 = vpack.c.b16 %v287, %v286
    %v301 = vpack.c.b16 %v289, %v288
    %v302 = vpack.c.b16 %v291, %v290
    %v303 = vpack.c.b16 %v293, %v292
    %v304 = vpack.c.b16 %v295, %v294
    %v305 = vpack.c.b16 %v297, %v296
    %314 = vmatprep.subr.bf16.mxu0 0
    %315 = vmatpush1.bf16.msra.mxu0 %v298
    %316 = vmatprep.subr.bf16.mxu0 0
    %317 = vmatpush1.bf16.msra.mxu0 %v299
    %318 = vmatprep.subr.bf16.mxu0 0
    %319 = vmatpush1.bf16.msra.mxu0 %v300
    %320 = vmatprep.subr.bf16.mxu0 0
    %321 = vmatpush1.bf16.msra.mxu0 %v301
    %322 = vmatprep.subr.bf16.mxu0 0
    %323 = vmatpush1.bf16.msra.mxu0 %v302
    %324 = vmatprep.subr.bf16.mxu0 0
    %325 = vmatpush1.bf16.msra.mxu0 %v303
    %326 = vmatprep.subr.bf16.mxu0 0
    %327 = vmatpush1.bf16.msra.mxu0 %v304
    %328 = vmatprep.subr.bf16.mxu0 0
    %329 = vmatpush1.bf16.msra.mxu0 %v305
    %330 = vmatprep.subr.bf16.mxu0 0
    %331 = vmatpush1.bf16.msra.mxu0 0
    %332 = vmatprep.subr.bf16.mxu0 0
    %333 = vmatpush1.bf16.msra.mxu0 0
    %334 = vmatprep.subr.bf16.mxu0 0
    %335 = vmatpush1.bf16.msra.mxu0 0
    %336 = vmatprep.subr.bf16.mxu0 0
    %337 = vmatpush1.bf16.msra.mxu0 0
    %338 = vmatprep.subr.bf16.mxu0 0
    %339 = vmatpush1.bf16.msra.mxu0 0
    %340 = vmatprep.subr.bf16.mxu0 0
    %341 = vmatpush1.bf16.msra.mxu0 0
    %342 = vmatprep.subr.bf16.mxu0 0
    %343 = vmatpush1.bf16.msra.mxu0 0
    %344 = vmatprep.subr.bf16.mxu0 0
    %345 = vmatpush1.bf16.msra.mxu0 0
    %346 = vmatprep.mubr.bf16.mxu0 0
    %347 = vmatmul.mubr.bf16.gmra.mrb[0].mxu0 %v242
    %v348 = vpop.f32.mrb[0].mxu0
    %v349 = vadd.f32 %v264, %v348
    %v350 = vpop.f32.mrb[0].mxu0
    %v351 = vpop.f32.mrb[0].mxu0
    %v352 = vpop.f32.mrb[0].mxu0
    %353 = vdwg.mxu0
    %vm354 = vcmask 31744
    %355 = vst.msk [vmem:[%s10] sm:$0xff] %vm354, %v349
    %v356 = vld [vmem:[%s1] sm:$0xff]
    %v357 = vsub.f32 %v356, %v349
    %v358 = vld [vmem:[%s8] sm:$0x1]
    %v360 = vlaneseq
    %v361 = vshrl.u32 %v360, 7
    %v362 = vsub.s32 0, %v361
    %v363 = vrot.slane %v358, %v362
    %v365 = vmul.f32 %v357, %v363
    %v366 = vmul.f32 %v365, %v365
    %v367 = vsel %vm354, %v366, 0.0
    %368 = vadd.xlane.f32.xlu0 %v367
    %v369 = vpop.xlane.xlu0 %368
    %v370 = vmul.f32 %v369, -0.5
    %v371 = vld [vmem:[#allocation2] sm:$0x1]
    %v373 = vlaneseq
    %v374 = vshrl.u32 %v373, 7
    %v375 = vsub.s32 0, %v374
    %v376 = vrot.slane %v371, %v375
    %v378 = vadd.f32 %v370, %v376
    %vm379 = vcmask 7168
    %380 = vst.msk [vmem:[%s11] sm:$0xff] %vm379, %v378
    // Predicated region
    $region50: #{tpu_custom_call.1} parent=1 // pred_check
      _
    $region51: #{tpu_custom_call.1} parent=1 // pred_check_branch
      %382 = sbr.rel (0) target = $region53
    $region52: #{tpu_custom_call.1} parent=1 // pred_region
      _
    $region53: #{tpu_custom_call.1} parent=1 // pred_fallthru
      _
    // Predicated region
    $region54: #{tpu_custom_call.1} parent=1 // pred_check
      _
    $region55: #{tpu_custom_call.1} parent=1 // pred_check_branch
      %384 = sbr.rel (0) target = $region57
    $region56: #{tpu_custom_call.1} parent=1 // pred_region
      _
    $region57: #{tpu_custom_call.1} parent=1 // pred_fallthru
      _
    // Predicated region
    $region58: #{tpu_custom_call.1} parent=1 // pred_check
      _
    $region59: #{tpu_custom_call.1} parent=1 // pred_check_branch
      %386 = sbr.rel (0) target = $region61
    $region60: #{tpu_custom_call.1} parent=1 // pred_region
      _
    $region61: #{tpu_custom_call.1} parent=1 // pred_fallthru
      _
    // Predicated region
    $region62: #{tpu_custom_call.1} parent=1 // pred_check
      _
    $region63: #{tpu_custom_call.1} parent=1 // pred_check_branch
      %388 = sbr.rel (0) target = $region65
    $region64: #{tpu_custom_call.1} parent=1 // pred_region
      _
    $region65: #{tpu_custom_call.1} parent=1 // pred_fallthru
      _
    %389 = vsyncpa [#allocation4], 1
    %390 = vsyncpa [#allocation6], 1

</llo_original>
